<compile_context>
chip_gen: v6e
topology: v6e:2x2x1
jax: 0.10.0
libtpu: 0.0.40
codegen_flags: <defaults>
</compile_context>

<pallas_src>
import functools

import jax
import jax.numpy as jnp
from jax import lax
from jax.experimental import pallas as pl
from jax.experimental.pallas import tpu as pltpu

EPS = 1e-6
LANE = 128


def _round_up(x, m):
    return ((x + m - 1) // m) * m


def _loss_partials_kernel(pred_ref, target_ref, out_ref,
                          acc_sq, acc_rel, acc_cnt,
                          *, block_rows, rows_valid, inner_steps):
    step = pl.program_id(1)
    n_inner = pl.num_programs(1)

    @pl.when(step == 0)
    def _():
        acc_sq[...] = jnp.zeros_like(acc_sq)
        acc_rel[...] = jnp.zeros_like(acc_rel)
        acc_cnt[...] = jnp.zeros_like(acc_cnt)

    # Logical tile index (unclamped).  The input index_map clamps so DMAs never
    # start past the last real tile; rows beyond the real data (partial last
    # tile or duplicated clamped tail tiles) are masked to zero here.
    blk = pl.program_id(0) * inner_steps + step
    row0 = blk * block_rows
    row_ids = row0 + lax.broadcasted_iota(jnp.int32, (block_rows, LANE), 0)
    valid = row_ids < rows_valid

    p = jnp.where(valid, pred_ref[...].astype(jnp.float32), 0.0)
    t = jnp.where(valid, target_ref[...].astype(jnp.float32), 0.0)

    diff = p - t
    mask = t > EPS
    # Note: keep the where() select (do NOT rewrite as mask * rel) — if t is
    # ever ~ -EPS the unselected branch can be inf/nan, which the TPU select
    # safely discards.
    rel = jnp.where(mask, jnp.abs(diff) / (t + EPS), 0.0)

    def _fold(x):
        # (block_rows, 128) -> (8, 128): sum over the leading axis is pure
        # VPU vreg adds (no XLU cross-lane reduction, no layout change).
        return x.reshape(block_rows // 8, 8, LANE).sum(axis=0)

    acc_sq[...] += _fold(diff * diff)
    acc_rel[...] += _fold(rel)
    acc_cnt[...] += _fold(mask.astype(jnp.float32))

    @pl.when(step == n_inner - 1)
    def _():
        out_ref[0, 0] = acc_sq[...]
        out_ref[0, 1] = acc_rel[...]
        out_ref[0, 2] = acc_cnt[...]


def power_forecast_loss(pred, target, alpha=0.7, block_rows=1024, num_parts=2):
    assert pred.shape == target.shape
    assert block_rows % 8 == 0
    n = pred.size
    n_total = float(n)

    # Flatten (free reshape of a contiguous array).  Only pad if the element
    # count is not a multiple of the lane width; the pad is < 128 zeros and
    # contributes 0 to both reductions.
    p_flat = jnp.ravel(pred)
    t_flat = jnp.ravel(target)
    rows = pl.cdiv(n, LANE)
    padded = rows * LANE
    if padded != n:
        p_flat = jnp.pad(p_flat, (0, padded - n))
        t_flat = jnp.pad(t_flat, (0, padded - n))
    p2 = p_flat.reshape(rows, LANE)
    t2 = t_flat.reshape(rows, LANE)

    # Tile / grid selection.  Small inputs collapse to a single tile so the
    # pipeline prologue/epilogue disappears.
    br = min(block_rows, _round_up(rows, 8))
    total_blocks = pl.cdiv(rows, br)
    parts = max(1, min(int(num_parts), total_blocks))
    inner_steps = pl.cdiv(total_blocks, parts)

    def in_index_map(p, i):
        # Clamp so the DMA never starts out of bounds; duplicated tail tiles
        # are fully masked inside the kernel.
        return (jnp.minimum(p * inner_steps + i, total_blocks - 1), 0)

    kernel = functools.partial(
        _loss_partials_kernel,
        block_rows=br, rows_valid=rows, inner_steps=inner_steps)

    partials = pl.pallas_call(
        kernel,
        out_shape=jax.ShapeDtypeStruct((parts, 3, 8, LANE), jnp.float32),
        grid_spec=pltpu.PrefetchScalarGridSpec(
            num_scalar_prefetch=0,
            grid=(parts, inner_steps),
            in_specs=[
                pl.BlockSpec((br, LANE), in_index_map),
                pl.BlockSpec((br, LANE), in_index_map),
            ],
            out_specs=pl.BlockSpec((1, 3, 8, LANE), lambda p, i: (p, 0, 0, 0)),
            scratch_shapes=[
                pltpu.VMEM((8, LANE), jnp.float32),
                pltpu.VMEM((8, LANE), jnp.float32),
                pltpu.VMEM((8, LANE), jnp.float32),
            ],
        ),
        compiler_params=pltpu.CompilerParams(
            dimension_semantics=("parallel", "arbitrary"),
        ),
    )(p2, t2)

    # Tiny final combine in plain JAX (keeps alpha out of the kernel).
    sum_sq = jnp.sum(partials[:, 0])
    sum_rel = jnp.sum(partials[:, 1])
    n_mask = jnp.sum(partials[:, 2])
    mse = sum_sq / n_total
    metric = jnp.where(n_mask > 0.0, sum_rel / jnp.maximum(n_mask, 1.0), 0.0)
    return alpha * mse + (1.0 - alpha) * metric


def _reference_loss(pred, target, alpha=0.7):
    pred = pred.astype(jnp.float32)
    target = target.astype(jnp.float32)
    mse = jnp.mean((pred - target) ** 2)
    mask = target > EPS
    n_mask = jnp.sum(mask)
    rel = jnp.where(mask, jnp.abs(pred - target) / (target + EPS), 0.0)
    metric = jnp.where(n_mask > 0, jnp.sum(rel) / jnp.maximum(n_mask, 1), 0.0)
    return alpha * mse + (1.0 - alpha) * metric


if __name__ == "__main__":
    key = jax.random.PRNGKey(0)
    k1, k2, k3, k4 = jax.random.split(key, 4)

    # Primary case: NCHW-ish power-forecast grid.
    shape = (2, 4, 16, 16)
    target = jnp.maximum(
        jax.random.uniform(k1, shape, dtype=jnp.float32, minval=-0.5, maxval=2.0),
        0.0)  # power targets are non-negative; many exact zeros (masked out)
    pred = target + 0.1 * jax.random.normal(k2, shape, dtype=jnp.float32)

    loss = jax.block_until_ready(power_forecast_loss(pred, target, alpha=0.7))
    ref = jax.block_until_ready(_reference_loss(pred, target, alpha=0.7))
    assert jnp.allclose(loss, ref, rtol=1e-5, atol=1e-6), (loss, ref)

    # Ragged, multi-tile case: exercises the in-kernel tail mask, the clamped
    # index map, and the 2-part ("parallel") reduction axis.
    shape2 = (3, 5, 7, 11)  # 1155 elements, not a multiple of 128
    target2 = jnp.maximum(
        jax.random.uniform(k3, shape2, dtype=jnp.float32, minval=-0.5, maxval=2.0),
        0.0)
    pred2 = target2 + 0.1 * jax.random.normal(k4, shape2, dtype=jnp.float32)
    loss2 = jax.block_until_ready(
        power_forecast_loss(pred2, target2, alpha=0.7, block_rows=8, num_parts=2))
    ref2 = jax.block_until_ready(_reference_loss(pred2, target2, alpha=0.7))
    assert jnp.allclose(loss2, ref2, rtol=1e-5, atol=1e-6), (loss2, ref2)

    print("KERNEL_OK")
</pallas_src>

<mosaic_0001>
module attributes {stable_mosaic.version = 11 : i64} {
  func.func @_loss_partials_kernel(%arg0: i32, %arg1: i32, %arg2: memref<16x128xf32, #tpu.memory_space<vmem>>, %arg3: memref<16x128xf32, #tpu.memory_space<vmem>>, %arg4: memref<1x3x8x128xf32, #tpu.memory_space<vmem>>, %arg5: memref<8x128xf32, #tpu.memory_space<vmem>>, %arg6: memref<8x128xf32, #tpu.memory_space<vmem>>, %arg7: memref<8x128xf32, #tpu.memory_space<vmem>>) attributes {dimension_semantics = [#tpu.dimension_semantics<parallel>, #tpu.dimension_semantics<arbitrary>], iteration_bounds = array<i64: 1, 1>, scalar_prefetch = 0 : i64, scratch_operands = 3 : i64, tpu.core_type = #tpu.core_type<tc>, window_params = [{transform_indices = @transform_0, window_bounds = array<i64: 16, 128>}, {transform_indices = @transform_1, window_bounds = array<i64: 16, 128>}, {transform_indices = @transform_2, window_bounds = array<i64: 1, 3, 8, 128>}]} {
    %c0_i32 = arith.constant 0 : i32
    %0 = arith.cmpi eq, %arg1, %c0_i32 : i32
    %1 = arith.extui %0 : i1 to i32
    %c0_i32_0 = arith.constant 0 : i32
    %2 = arith.cmpi ne, %1, %c0_i32_0 : i32
    scf.if %2 {
      %cst_26 = arith.constant 0.000000e+00 : f32
      %47 = vector.broadcast %cst_26 : f32 to vector<8x128xf32>
      %c0_27 = arith.constant 0 : index
      %c0_28 = arith.constant 0 : index
      %48 = vector.load %arg5[%c0_27, %c0_28] : memref<8x128xf32, #tpu.memory_space<vmem>>, vector<8x128xf32>
      tpu.vector_store %arg5[%c0_27, %c0_28], %47 {strides = array<i32>} : memref<8x128xf32, #tpu.memory_space<vmem>>, vector<8x128xf32>,
      %cst_29 = arith.constant 0.000000e+00 : f32
      %49 = vector.broadcast %cst_29 : f32 to vector<8x128xf32>
      %c0_30 = arith.constant 0 : index
      %c0_31 = arith.constant 0 : index
      %50 = vector.load %arg6[%c0_30, %c0_31] : memref<8x128xf32, #tpu.memory_space<vmem>>, vector<8x128xf32>
      tpu.vector_store %arg6[%c0_30, %c0_31], %49 {strides = array<i32>} : memref<8x128xf32, #tpu.memory_space<vmem>>, vector<8x128xf32>,
      %cst_32 = arith.constant 0.000000e+00 : f32
      %51 = vector.broadcast %cst_32 : f32 to vector<8x128xf32>
      %c0_33 = arith.constant 0 : index
      %c0_34 = arith.constant 0 : index
      %52 = vector.load %arg7[%c0_33, %c0_34] : memref<8x128xf32, #tpu.memory_space<vmem>>, vector<8x128xf32>
      tpu.vector_store %arg7[%c0_33, %c0_34], %51 {strides = array<i32>} : memref<8x128xf32, #tpu.memory_space<vmem>>, vector<8x128xf32>,
    } else {
    }
    %c1_i32 = arith.constant 1 : i32
    %3 = arith.muli %arg0, %c1_i32 : i32
    %4 = arith.addi %3, %arg1 : i32
    %c16_i32 = arith.constant 16 : i32
    %5 = arith.muli %4, %c16_i32 : i32
    %6 = tpu.iota {dimensions = array<i32: 0>} : vector<16x128xi32>
    %7 = vector.broadcast %5 : i32 to vector<16x128xi32>
    %8 = arith.addi %7, %6 : vector<16x128xi32>
    %c16_i32_1 = arith.constant 16 : i32
    %9 = vector.broadcast %c16_i32_1 : i32 to vector<16x128xi32>
    %10 = arith.cmpi slt, %8, %9 : vector<16x128xi32>
    %c0 = arith.constant 0 : index
    %c0_2 = arith.constant 0 : index
    %11 = vector.load %arg2[%c0, %c0_2] : memref<16x128xf32, #tpu.memory_space<vmem>>, vector<16x128xf32>
    %cst = arith.constant 0.000000e+00 : f32
    %12 = vector.broadcast %cst : f32 to vector<16x128xf32>
    %13 = arith.select %10, %11, %12 : vector<16x128xi1>, vector<16x128xf32>
    %c0_3 = arith.constant 0 : index
    %c0_4 = arith.constant 0 : index
    %14 = vector.load %arg3[%c0_3, %c0_4] : memref<16x128xf32, #tpu.memory_space<vmem>>, vector<16x128xf32>
    %cst_5 = arith.constant 0.000000e+00 : f32
    %15 = vector.broadcast %cst_5 : f32 to vector<16x128xf32>
    %16 = arith.select %10, %14, %15 : vector<16x128xi1>, vector<16x128xf32>
    %17 = arith.subf %13, %16 : vector<16x128xf32>
    %cst_6 = arith.constant 9.99999997E-7 : f32
    %18 = vector.broadcast %cst_6 : f32 to vector<16x128xf32>
    %19 = arith.cmpf ogt, %16, %18 : vector<16x128xf32>
    %20 = math.absf %17 : vector<16x128xf32>
    %cst_7 = arith.constant 9.99999997E-7 : f32
    %21 = vector.broadcast %cst_7 : f32 to vector<16x128xf32>
    %22 = arith.addf %16, %21 : vector<16x128xf32>
    %23 = arith.divf %20, %22 : vector<16x128xf32>
    %cst_8 = arith.constant 0.000000e+00 : f32
    %24 = vector.broadcast %cst_8 : f32 to vector<16x128xf32>
    %25 = arith.select %19, %23, %24 : vector<16x128xi1>, vector<16x128xf32>
    %c0_9 = arith.constant 0 : index
    %c0_10 = arith.constant 0 : index
    %26 = vector.load %arg5[%c0_9, %c0_10] : memref<8x128xf32, #tpu.memory_space<vmem>>, vector<8x128xf32>
    %27 = arith.mulf %17, %17 : vector<16x128xf32>
    %28 = vector.shape_cast %27 : vector<16x128xf32> to vector<2x8x128xf32>
    %cst_11 = arith.constant dense<0.000000e+00> : vector<8x128xf32>
    %29 = vector.multi_reduction <add>, %28, %cst_11 [0] : vector<2x8x128xf32> to vector<8x128xf32>
    %30 = arith.addf %26, %29 : vector<8x128xf32>
    %c0_12 = arith.constant 0 : index
    %c0_13 = arith.constant 0 : index
    %31 = vector.load %arg5[%c0_12, %c0_13] : memref<8x128xf32, #tpu.memory_space<vmem>>, vector<8x128xf32>
    tpu.vector_store %arg5[%c0_12, %c0_13], %30 {strides = array<i32>} : memref<8x128xf32, #tpu.memory_space<vmem>>, vector<8x128xf32>,
    %c0_14 = arith.constant 0 : index
    %c0_15 = arith.constant 0 : index
    %32 = vector.load %arg6[%c0_14, %c0_15] : memref<8x128xf32, #tpu.memory_space<vmem>>, vector<8x128xf32>
    %33 = vector.shape_cast %25 : vector<16x128xf32> to vector<2x8x128xf32>
    %cst_16 = arith.constant dense<0.000000e+00> : vector<8x128xf32>
    %34 = vector.multi_reduction <add>, %33, %cst_16 [0] : vector<2x8x128xf32> to vector<8x128xf32>
    %35 = arith.addf %32, %34 : vector<8x128xf32>
    %c0_17 = arith.constant 0 : index
    %c0_18 = arith.constant 0 : index
    %36 = vector.load %arg6[%c0_17, %c0_18] : memref<8x128xf32, #tpu.memory_space<vmem>>, vector<8x128xf32>
    tpu.vector_store %arg6[%c0_17, %c0_18], %35 {strides = array<i32>} : memref<8x128xf32, #tpu.memory_space<vmem>>, vector<8x128xf32>,
    %c0_19 = arith.constant 0 : index
    %c0_20 = arith.constant 0 : index
    %37 = vector.load %arg7[%c0_19, %c0_20] : memref<8x128xf32, #tpu.memory_space<vmem>>, vector<8x128xf32>
    %38 = arith.extui %19 : vector<16x128xi1> to vector<16x128xi32>
    %39 = arith.sitofp %38 : vector<16x128xi32> to vector<16x128xf32>
    %40 = vector.shape_cast %39 : vector<16x128xf32> to vector<2x8x128xf32>
    %cst_21 = arith.constant dense<0.000000e+00> : vector<8x128xf32>
    %41 = vector.multi_reduction <add>, %40, %cst_21 [0] : vector<2x8x128xf32> to vector<8x128xf32>
    %42 = arith.addf %37, %41 : vector<8x128xf32>
    %c0_22 = arith.constant 0 : index
    %c0_23 = arith.constant 0 : index
    %43 = vector.load %arg7[%c0_22, %c0_23] : memref<8x128xf32, #tpu.memory_space<vmem>>, vector<8x128xf32>
    tpu.vector_store %arg7[%c0_22, %c0_23], %42 {strides = array<i32>} : memref<8x128xf32, #tpu.memory_space<vmem>>, vector<8x128xf32>,
    %c0_i32_24 = arith.constant 0 : i32
    %44 = arith.cmpi eq, %arg1, %c0_i32_24 : i32
    %45 = arith.extui %44 : i1 to i32
    %c0_i32_25 = arith.constant 0 : i32
    %46 = arith.cmpi ne, %45, %c0_i32_25 : i32
    scf.if %46 {
      %c0_26 = arith.constant 0 : index
      %c0_27 = arith.constant 0 : index
      %47 = vector.load %arg5[%c0_26, %c0_27] : memref<8x128xf32, #tpu.memory_space<vmem>>, vector<8x128xf32>
      %c0_28 = arith.constant 0 : index
      %c0_29 = arith.constant 0 : index
      %c0_30 = arith.constant 0 : index
      %c0_31 = arith.constant 0 : index
      %48 = vector.load %arg4[%c0_28, %c0_29, %c0_30, %c0_31] : memref<1x3x8x128xf32, #tpu.memory_space<vmem>>, vector<1x1x8x128xf32>
      %49 = vector.shape_cast %48 : vector<1x1x8x128xf32> to vector<8x128xf32>
      %50 = vector.shape_cast %47 : vector<8x128xf32> to vector<1x1x8x128xf32>
      tpu.vector_store %arg4[%c0_28, %c0_29, %c0_30, %c0_31], %50 {strides = array<i32>} : memref<1x3x8x128xf32, #tpu.memory_space<vmem>>, vector<1x1x8x128xf32>,
      %c0_32 = arith.constant 0 : index
      %c0_33 = arith.constant 0 : index
      %51 = vector.load %arg6[%c0_32, %c0_33] : memref<8x128xf32, #tpu.memory_space<vmem>>, vector<8x128xf32>
      %c0_34 = arith.constant 0 : index
      %c1 = arith.constant 1 : index
      %c0_35 = arith.constant 0 : index
      %c0_36 = arith.constant 0 : index
      %52 = vector.load %arg4[%c0_34, %c1, %c0_35, %c0_36] : memref<1x3x8x128xf32, #tpu.memory_space<vmem>>, vector<1x1x8x128xf32>
      %53 = vector.shape_cast %52 : vector<1x1x8x128xf32> to vector<8x128xf32>
      %54 = vector.shape_cast %51 : vector<8x128xf32> to vector<1x1x8x128xf32>
      tpu.vector_store %arg4[%c0_34, %c1, %c0_35, %c0_36], %54 {strides = array<i32>} : memref<1x3x8x128xf32, #tpu.memory_space<vmem>>, vector<1x1x8x128xf32>,
      %c0_37 = arith.constant 0 : index
      %c0_38 = arith.constant 0 : index
      %55 = vector.load %arg7[%c0_37, %c0_38] : memref<8x128xf32, #tpu.memory_space<vmem>>, vector<8x128xf32>
      %c0_39 = arith.constant 0 : index
      %c2 = arith.constant 2 : index
      %c0_40 = arith.constant 0 : index
      %c0_41 = arith.constant 0 : index
      %56 = vector.load %arg4[%c0_39, %c2, %c0_40, %c0_41] : memref<1x3x8x128xf32, #tpu.memory_space<vmem>>, vector<1x1x8x128xf32>
      %57 = vector.shape_cast %56 : vector<1x1x8x128xf32> to vector<8x128xf32>
      %58 = vector.shape_cast %55 : vector<8x128xf32> to vector<1x1x8x128xf32>
      tpu.vector_store %arg4[%c0_39, %c2, %c0_40, %c0_41], %58 {strides = array<i32>} : memref<1x3x8x128xf32, #tpu.memory_space<vmem>>, vector<1x1x8x128xf32>,
    } else {
    }
    return
  }
  func.func @transform_0(%arg0: i32, %arg1: i32) -> (i32, i32) {
    %c1_i32 = arith.constant 1 : i32
    %0 = arith.muli %arg0, %c1_i32 : i32
    %1 = arith.addi %0, %arg1 : i32
    %c0_i32 = arith.constant 0 : i32
    %2 = arith.minsi %1, %c0_i32 : i32
    %c0_i32_0 = arith.constant 0 : i32
    %c0_i32_1 = arith.constant 0 : i32
    return %2, %c0_i32_0 : i32, i32
  }
  func.func @transform_1(%arg0: i32, %arg1: i32) -> (i32, i32) {
    %c1_i32 = arith.constant 1 : i32
    %0 = arith.muli %arg0, %c1_i32 : i32
    %1 = arith.addi %0, %arg1 : i32
    %c0_i32 = arith.constant 0 : i32
    %2 = arith.minsi %1, %c0_i32 : i32
    %c0_i32_0 = arith.constant 0 : i32
    %c0_i32_1 = arith.constant 0 : i32
    return %2, %c0_i32_0 : i32, i32
  }
  func.func @transform_2(%arg0: i32, %arg1: i32) -> (i32, i32, i32, i32) {
    %c0_i32 = arith.constant 0 : i32
    %c0_i32_0 = arith.constant 0 : i32
    %c0_i32_1 = arith.constant 0 : i32
    %c0_i32_2 = arith.constant 0 : i32
    return %arg0, %c0_i32, %c0_i32_0, %c0_i32_1 : i32, i32, i32, i32
  }
}

</mosaic_0001>

<llo_original>
// kernel: tpu_custom_call.1
$region0: #{tpu_custom_call.1}
  #allocation0 [shape = 'u32[]', space=smem, size = 0x4, offset = 0x4, fixed_abs, tag = 'smem constant byte address 0x4 - core index']
  #allocation1 [shape = 'u32[144,128]{1,0:T(1,128)}', space=vmem, size = 0x12000, scoped, tag = 'internal scratch']
  #allocation2 [shape = 'f32[8,128]{1,0:T(8,128)}', space=vmem, size = 0x1000, scoped, tag = 'scratch operand']
  #allocation3 [shape = 'f32[8,128]{1,0:T(8,128)}', space=vmem, size = 0x1000, scoped, tag = 'scratch operand']
  #allocation4 [shape = 'f32[8,128]{1,0:T(8,128)}', space=vmem, size = 0x1000, scoped, tag = 'scratch operand']
  %s0 = inlined_call_operand.hbm [shape: f32[16,128], index: 0, kind: input, shape index: {}]
  %s1 = inlined_call_operand.hbm [shape: f32[16,128], index: 1, kind: input, shape index: {}]
  %s2 = inlined_call_operand.hbm [shape: f32[1,3,8,128], index: 2, kind: output, shape index: {}]
  %s3 = sld [smem:[#allocation0]]
  $region34: #{tpu_custom_call.1} parent=0
    _
  %s5 = ssub.s32 1, %s3
  %s6 = scalar_select 0, %s5, %s3
  $region1: #{tpu_custom_call.1} parent=0
    #allocation5 [shape = 'u8[8192]{0}', space=vmem, size = 0x2000, scoped, tag = 'input window, operand 0, single buffered']
    #allocation6 [shape = 's32[1]{0}', space=sflag, size = 0x4, scoped, tag = 'scoped memory for tpu_custom_call.1']
    #allocation7 [shape = 's32[1]{0}', space=sflag, size = 0x4, scoped, tag = 'scoped memory for tpu_custom_call.1']
    #allocation8 [shape = 'u8[8192]{0}', space=vmem, size = 0x2000, scoped, tag = 'input window, operand 1, single buffered']
    #allocation9 [shape = 's32[1]{0}', space=sflag, size = 0x4, scoped, tag = 'scoped memory for tpu_custom_call.1']
    #allocation10 [shape = 'u8[12288]{0}', space=vmem, size = 0x3000, scoped, tag = 'output window, operand 0, single buffered']
    %7 = vsyncpa [#allocation6], 0
    %8 = vsyncpa [#allocation9], 0
    %9 = vsyncpa [#allocation7], 0
    // Predicated region
    $region2: #{tpu_custom_call.1} parent=1 // pred_check
      _
    $region3: #{tpu_custom_call.1} parent=1 // pred_check_branch
      %11 = sbr.rel (0) target = $region5
    $region4: #{tpu_custom_call.1} parent=1 // pred_region
      %s12 = sadd.s32 0, 0
      %p13 = scmp.lt.s32.totalorder %s12, 0
      %s14 = scalar_select %p13, %s12, 0
      %s15 = smul.u32 2, %s14
      %s17 = ssub.s32 256, 256
      %18 = vsyncadd [#allocation6], %s17
      %s19 = smul.addr %s15, 128
      %s20 = scalar_lea.hbm %s0, %s19
      %s21 = sshll.u32 [#allocation5], 4
      %s22 = int_to_ptr.vmem [resolvable:$true] %s21
      %27 = dma.hbm_to_vmem [thread:$0]  %s20, 256, %s22, [#allocation6], 128, 128, 8
    $region5: #{tpu_custom_call.1} parent=1 // pred_fallthru
      _
    // Predicated region
    $region6: #{tpu_custom_call.1} parent=1 // pred_check
      _
    $region7: #{tpu_custom_call.1} parent=1 // pred_check_branch
      %29 = sbr.rel (0) target = $region9
    $region8: #{tpu_custom_call.1} parent=1 // pred_region
      %s30 = sadd.s32 0, 0
      %p31 = scmp.lt.s32.totalorder %s30, 0
      %s32 = scalar_select %p31, %s30, 0
      %s33 = smul.u32 2, %s32
      %s35 = ssub.s32 256, 256
      %36 = vsyncadd [#allocation9], %s35
      %s37 = smul.addr %s33, 128
      %s38 = scalar_lea.hbm %s1, %s37
      %s39 = sshll.u32 [#allocation8], 4
      %s40 = int_to_ptr.vmem [resolvable:$true] %s39
      %45 = dma.hbm_to_vmem [thread:$0]  %s38, 256, %s40, [#allocation9], 128, 128, 8
    $region9: #{tpu_custom_call.1} parent=1 // pred_fallthru
      _
    // Predicated region
    $region10: #{tpu_custom_call.1} parent=1 // pred_check
      _
    $region11: #{tpu_custom_call.1} parent=1 // pred_check_branch
      %47 = sbr.rel (0) target = $region13
    $region12: #{tpu_custom_call.1} parent=1 // pred_region
      %48 = dma.done [#allocation6], 256
    $region13: #{tpu_custom_call.1} parent=1 // pred_fallthru
      _
    // Predicated region
    $region14: #{tpu_custom_call.1} parent=1 // pred_check
      _
    $region15: #{tpu_custom_call.1} parent=1 // pred_check_branch
      %50 = sbr.rel (0) target = $region17
    $region16: #{tpu_custom_call.1} parent=1 // pred_region
      %51 = dma.done [#allocation9], 256
    $region17: #{tpu_custom_call.1} parent=1 // pred_fallthru
      _
    %s52 = sadd.s32 0, 0
    %p53 = scmp.lt.s32.totalorder %s52, 0
    %s54 = scalar_select %p53, %s52, 0
    %s55 = smul.u32 2, %s54
    %s56 = sadd.s32 0, 0
    %p57 = scmp.lt.s32.totalorder %s56, 0
    %s58 = scalar_select %p57, %s56, 0
    %s59 = smul.u32 2, %s58
    %p60 = scmp.eq.s32.totalorder 0, 0
    // Predicated region
    $region18: #{tpu_custom_call.1} parent=1 // pred_check
      %p61 = pneg %p60
    $region19: #{tpu_custom_call.1} parent=1 // pred_check_branch
      %63 = sbr.rel (%p61) target = $region21
    $region20: #{tpu_custom_call.1} parent=1 // pred_region
      %64 = vst [vmem:[#allocation2] sm:$0xff] 0.0
      %65 = vst [vmem:[#allocation3] sm:$0xff] 0.0
      %66 = vst [vmem:[#allocation4] sm:$0xff] 0.0
    $region21: #{tpu_custom_call.1} parent=1 // pred_fallthru
      _
    %s67 = sadd.s32 0, 0
    %s68 = smul.u32 %s67, 16
    %v69 = vlaneseq
    %v70 = vshrl.u32 %v69, 7
    %v71 = vadd.s32 %v70, 8
    %v72 = vstv %s68
    %v73 = vadd.s32 %v72, %v70
    %v74 = vadd.s32 %v72, %v71
    %vm75 = vcmp.lt.s32.totalorder %v73, 16
    %vm76 = vcmp.lt.s32.totalorder %v74, 16
    %v77 = vld [vmem:[#allocation5] sm:$0xff]
    %v78 = vld [vmem:[#allocation5 + $0x8] sm:$0xff]
    %v79 = vsel %vm75, %v77, 0.0
    %v80 = vsel %vm76, %v78, 0.0
    %v81 = vld [vmem:[#allocation8] sm:$0xff]
    %v82 = vld [vmem:[#allocation8 + $0x8] sm:$0xff]
    %v83 = vsel %vm75, %v81, 0.0
    %v84 = vsel %vm76, %v82, 0.0
    %v85 = vsub.f32 %v79, %v83
    %v86 = vsub.f32 %v80, %v84
    %vm87 = vcmp.gt.f32.partialorder %v83, 1e-06
    %vm88 = vcmp.gt.f32.partialorder %v84, 1e-06
    %v89 = vand.u32 2147483647, %v85
    %v90 = vand.u32 2147483647, %v86
    %v91 = vadd.f32 %v83, 1e-06
    %v92 = vadd.f32 %v84, 1e-06
    %v93 = vrcp.pop %v91
    %v94 = vmul.f32 %v89, %v93
    %v95 = vrcp.pop %v92
    %v96 = vmul.f32 %v90, %v95
    %v97 = vsel %vm87, %v94, 0.0
    %v98 = vsel %vm88, %v96, 0.0
    %v99 = vld [vmem:[#allocation2] sm:$0xff]
    %v100 = vmul.f32 %v85, %v85
    %v101 = vmul.f32 %v86, %v86
    %v102 = vadd.f32 %v100, %v101
    %v103 = vadd.f32 %v99, %v102
    %104 = vst [vmem:[#allocation2] sm:$0xff] %v103
    %v105 = vld [vmem:[#allocation3] sm:$0xff]
    %v106 = vadd.f32 %v97, %v98
    %v107 = vadd.f32 %v105, %v106
    %108 = vst [vmem:[#allocation3] sm:$0xff] %v107
    %v109 = vld [vmem:[#allocation4] sm:$0xff]
    %v110 = vsel %vm87, 1, 0
    %v111 = vsel %vm88, 1, 0
    %v112 = vcvt.s32.f32 %v110
    %v113 = vcvt.s32.f32 %v111
    %v114 = vadd.f32 %v112, %v113
    %v115 = vadd.f32 %v109, %v114
    %116 = vst [vmem:[#allocation4] sm:$0xff] %v115
    // Predicated region
    $region22: #{tpu_custom_call.1} parent=1 // pred_check
      %p117 = pneg %p60
    $region23: #{tpu_custom_call.1} parent=1 // pred_check_branch
      %119 = sbr.rel (%p117) target = $region25
    $region24: #{tpu_custom_call.1} parent=1 // pred_region
      %v120 = vld [vmem:[#allocation2] sm:$0xff]
      %121 = vst [vmem:[#allocation10] sm:$0xff] %v120
      %v122 = vld [vmem:[#allocation3] sm:$0xff]
      %s123 = scalar_lea.vmem [#allocation10], 8
      %124 = vst [vmem:[%s123] sm:$0xff] %v122
      %v125 = vld [vmem:[#allocation4] sm:$0xff]
      %s126 = scalar_lea.vmem [#allocation10], 16
      %127 = vst [vmem:[%s126] sm:$0xff] %v125
    $region25: #{tpu_custom_call.1} parent=1 // pred_fallthru
      _
    // Predicated region
    $region26: #{tpu_custom_call.1} parent=1 // pred_check
      _
    $region27: #{tpu_custom_call.1} parent=1 // pred_check_branch
      %129 = sbr.rel (0) target = $region29
    $region28: #{tpu_custom_call.1} parent=1 // pred_region
      %s131 = ssub.s32 384, 384
      %132 = vsyncadd [#allocation7], %s131
      %s133 = sshll.u32 [#allocation10], 4
      %s134 = int_to_ptr.vmem [resolvable:$true] %s133
      %139 = dma.vmem_to_hbm [thread:$0]  %s134, 384, %s2, [#allocation7], 128, 128, 8
    $region29: #{tpu_custom_call.1} parent=1 // pred_fallthru
      _
    // Predicated region
    $region30: #{tpu_custom_call.1} parent=1 // pred_check
      _
    $region31: #{tpu_custom_call.1} parent=1 // pred_check_branch
      %141 = sbr.rel (0) target = $region33
    $region32: #{tpu_custom_call.1} parent=1 // pred_region
      %142 = dma.done [#allocation7], 384
    $region33: #{tpu_custom_call.1} parent=1 // pred_fallthru
      _
    %143 = vsyncpa [#allocation6], 1
    %144 = vsyncpa [#allocation9], 1
    %145 = vsyncpa [#allocation7], 1

</llo_original>
